<compile_context>
chip_gen: v7x
topology: tpu7x:2x2x1
jax: 0.10.0
libtpu: 0.0.40
codegen_flags: <defaults>
</compile_context>

<pallas_src>
import functools

import jax
import jax.numpy as jnp
from jax.experimental import pallas as pl
from jax.experimental.pallas import tpu as pltpu

# TODO(synk): len(unique_movies) comes from movies.csv in the original module;
# use a fixed stand-in (non-multiple of 128 to exercise the full-dim block path).
NUM_MOVIES = 300
HID1 = 20
HID2 = 10


def _round_up(a: int, m: int) -> int:
    return ((a + m - 1) // m) * m


def _mlp_kernel(x_ref, w1_ref, b1_ref, w2_ref, b2_ref, w3_ref, b3_ref, o_ref):
    # One (TB, N) batch tile per grid step. Weights/biases are full blocks with
    # constant index_maps -> DMA'd once, resident in VMEM for the whole grid.
    x = x_ref[...].astype(jnp.bfloat16)                                  # in-kernel cast (VPU slack)
    h1 = jnp.dot(x, w1_ref[...], preferred_element_type=jnp.float32)     # (TB, 20) f32 acc on MXU
    h1 = jnp.maximum(h1 + b1_ref[...], 0.0)                              # bias + ReLU, stays f32
    h2 = jnp.dot(h1, w2_ref[...].astype(jnp.float32),                    # tiny (20,10) upcast
                 preferred_element_type=jnp.float32)
    h2 = jnp.maximum(h2 + b2_ref[...], 0.0)                              # stays f32
    out = jnp.dot(h2.astype(jnp.bfloat16), w3_ref[...],                  # (TB, N) f32 acc
                  preferred_element_type=jnp.float32) + b3_ref[...]
    o_ref[...] = out.astype(o_ref.dtype)


def _choose_tb(batch: int, n: int, x_itemsize: int, tb_cap: int) -> int:
    """Largest batch tile that keeps double-buffered streamed tiles in VMEM."""
    # Streamed per grid step: x tile (x_itemsize B/elem) + out tile (bf16), each
    # double-buffered. Keep under ~12 MiB so the v5e 16 MiB scoped default (and
    # v7x's smaller VMEM) always has headroom; weights are tiny and resident.
    vmem_budget = 12 * 1024 * 1024
    per_row = 2 * n * (x_itemsize + 2)
    tb = min(tb_cap, max(8, vmem_budget // max(per_row, 1)))
    # v7x megacore: guarantee the batch grid has >= 2 steps (both TCs get work).
    tb = min(tb, _round_up(pl.cdiv(batch, 2), 8))
    tb = max(8, (tb // 8) * 8)                      # sublane multiple of 8
    return tb


@functools.partial(jax.jit, static_argnames=("tb_cap",))
def recommender_forward(x, params, *, tb_cap: int = 2048):
    """Forward pass. x: (B, N); params from prepare_params(). Returns (B, N) bf16."""
    w1, b1, w2, b2, w3, b3 = params                 # bf16 weights (in,out), f32 (1,out) biases
    B, N = x.shape
    TB = _choose_tb(B, N, x.dtype.itemsize, tb_cap)
    grid = (pl.cdiv(B, TB),)                        # partial last tile handled by masked stores

    const = lambda a: pl.BlockSpec(a.shape, lambda i: (0, 0))   # VMEM-resident operands

    flops = 2 * B * (N * HID1 + HID1 * HID2 + HID2 * N)
    bytes_accessed = (
        B * N * (x.dtype.itemsize + 2)              # x in + bf16 out
        + sum(a.size * a.dtype.itemsize for a in (w1, b1, w2, b2, w3, b3))
    )

    return pl.pallas_call(
        _mlp_kernel,
        out_shape=jax.ShapeDtypeStruct((B, N), jnp.bfloat16),
        grid=grid,
        in_specs=[
            pl.BlockSpec((TB, N), lambda i: (i, 0)),            # x: batch-tiled, full feature dim
            const(w1), const(b1),
            const(w2), const(b2),
            const(w3), const(b3),
        ],
        out_specs=pl.BlockSpec((TB, N), lambda i: (i, 0)),
        compiler_params=pltpu.CompilerParams(
            dimension_semantics=("parallel",),                  # shard batch tiles across TCs (v7x)
        ),
        cost_estimate=pl.CostEstimate(
            flops=flops, transcendentals=0, bytes_accessed=bytes_accessed
        ),
    )(x, w1, b1, w2, b2, w3, b3)


def init_params(key, num_movies=NUM_MOVIES):
    # Deterministic init mimicking nn.Linear's U(-1/sqrt(in), 1/sqrt(in)).
    ks = jax.random.split(key, 6)

    def lin(kw, kb, fan_in, fan_out):
        bound = 1.0 / jnp.sqrt(jnp.float32(fan_in))
        # stored already transposed: (in, out)
        w = jax.random.uniform(kw, (fan_in, fan_out), jnp.float32, -bound, bound)
        b = jax.random.uniform(kb, (1, fan_out), jnp.float32, -bound, bound)
        return w, b

    w1, b1 = lin(ks[0], ks[1], num_movies, HID1)
    w2, b2 = lin(ks[2], ks[3], HID1, HID2)
    w3, b3 = lin(ks[4], ks[5], HID2, num_movies)
    return (w1, b1, w2, b2, w3, b3)


def prepare_params(params):
    """One-time, outside the jitted forward: bf16 weights, f32 2-D biases."""
    w1, b1, w2, b2, w3, b3 = params
    return (w1.astype(jnp.bfloat16), b1.astype(jnp.float32),
            w2.astype(jnp.bfloat16), b2.astype(jnp.float32),
            w3.astype(jnp.bfloat16), b3.astype(jnp.float32))


def reference_forward(x, params):
    w1, b1, w2, b2, w3, b3 = params
    h = jnp.maximum(x @ w1 + b1, 0.0)
    h = jnp.maximum(h @ w2 + b2, 0.0)
    return h @ w3 + b3


if __name__ == "__main__":
    key = jax.random.PRNGKey(0)
    k_x, k_p = jax.random.split(key)

    batch = 8
    x = jax.random.normal(k_x, (batch, NUM_MOVIES), jnp.float32)
    params_f32 = init_params(k_p)
    params = prepare_params(params_f32)            # hoisted one-time weight prep

    out = recommender_forward(x, params)
    out = jax.block_until_ready(out)

    ref = reference_forward(x, params_f32)
    assert out.shape == (batch, NUM_MOVIES)
    # bf16 x/weights (with f32 accumulation + f32 hidden activations) -> loosened
    # tolerance vs the pure-f32 reference.
    assert jnp.allclose(out.astype(jnp.float32), ref, atol=5e-2, rtol=5e-2)

    print("KERNEL_OK")
</pallas_src>

<mosaic_0001>
module attributes {stable_mosaic.version = 11 : i64} {
  func.func @_mlp_kernel(%arg0: i32, %arg1: memref<8x300xf32, #tpu.memory_space<vmem>>, %arg2: memref<300x20xbf16, #tpu.memory_space<vmem>>, %arg3: memref<1x20xf32, #tpu.memory_space<vmem>>, %arg4: memref<20x10xbf16, #tpu.memory_space<vmem>>, %arg5: memref<1x10xf32, #tpu.memory_space<vmem>>, %arg6: memref<10x300xbf16, #tpu.memory_space<vmem>>, %arg7: memref<1x300xf32, #tpu.memory_space<vmem>>, %arg8: memref<8x300xbf16, #tpu.memory_space<vmem>>) attributes {dimension_semantics = [#tpu.dimension_semantics<parallel>], iteration_bounds = array<i64: 1>, scalar_prefetch = 0 : i64, scratch_operands = 0 : i64, tpu.core_type = #tpu.core_type<tc>, window_params = [{transform_indices = @transform_0, window_bounds = array<i64: 8, 300>}, {pipeline_mode = #tpu.pipeline_mode<synchronous>, transform_indices = @transform_1, window_bounds = array<i64: 300, 20>}, {pipeline_mode = #tpu.pipeline_mode<synchronous>, transform_indices = @transform_2, window_bounds = array<i64: 1, 20>}, {pipeline_mode = #tpu.pipeline_mode<synchronous>, transform_indices = @transform_3, window_bounds = array<i64: 20, 10>}, {pipeline_mode = #tpu.pipeline_mode<synchronous>, transform_indices = @transform_4, window_bounds = array<i64: 1, 10>}, {pipeline_mode = #tpu.pipeline_mode<synchronous>, transform_indices = @transform_5, window_bounds = array<i64: 10, 300>}, {pipeline_mode = #tpu.pipeline_mode<synchronous>, transform_indices = @transform_6, window_bounds = array<i64: 1, 300>}, {transform_indices = @transform_7, window_bounds = array<i64: 8, 300>}]} {
    %c0 = arith.constant 0 : index
    %c0_0 = arith.constant 0 : index
    %0 = vector.load %arg1[%c0, %c0_0] : memref<8x300xf32, #tpu.memory_space<vmem>>, vector<8x300xf32>
    %1 = arith.truncf %0 : vector<8x300xf32> to vector<8x300xbf16>
    %c0_1 = arith.constant 0 : index
    %c0_2 = arith.constant 0 : index
    %2 = vector.load %arg2[%c0_1, %c0_2] : memref<300x20xbf16, #tpu.memory_space<vmem>>, vector<300x20xbf16>
    %cst = arith.constant dense<0.000000e+00> : vector<8x20xf32>
    %3 = tpu.matmul %1, %2, %cst {dimension_numbers = #tpu.dot_dimension_numbers<[1], [0], [0], [1], [0, 0, 1, 1], [], []>} : vector<8x300xbf16>, vector<300x20xbf16>, vector<8x20xf32> -> vector<8x20xf32>
    %c0_3 = arith.constant 0 : index
    %c0_4 = arith.constant 0 : index
    %4 = vector.load %arg3[%c0_3, %c0_4] : memref<1x20xf32, #tpu.memory_space<vmem>>, vector<1x20xf32>
    %5 = vector.broadcast %4 : vector<1x20xf32> to vector<8x20xf32>
    %6 = arith.addf %3, %5 : vector<8x20xf32>
    %cst_5 = arith.constant 0.000000e+00 : f32
    %7 = vector.broadcast %cst_5 : f32 to vector<8x20xf32>
    %8 = arith.maximumf %6, %7 : vector<8x20xf32>
    %c0_6 = arith.constant 0 : index
    %c0_7 = arith.constant 0 : index
    %9 = vector.load %arg4[%c0_6, %c0_7] : memref<20x10xbf16, #tpu.memory_space<vmem>>, vector<20x10xbf16>
    %10 = arith.extf %9 : vector<20x10xbf16> to vector<20x10xf32>
    %cst_8 = arith.constant dense<0.000000e+00> : vector<8x10xf32>
    %11 = tpu.matmul %8, %10, %cst_8 {dimension_numbers = #tpu.dot_dimension_numbers<[1], [0], [0], [1], [0, 0, 1, 1], [], []>} : vector<8x20xf32>, vector<20x10xf32>, vector<8x10xf32> -> vector<8x10xf32>
    %c0_9 = arith.constant 0 : index
    %c0_10 = arith.constant 0 : index
    %12 = vector.load %arg5[%c0_9, %c0_10] : memref<1x10xf32, #tpu.memory_space<vmem>>, vector<1x10xf32>
    %13 = vector.broadcast %12 : vector<1x10xf32> to vector<8x10xf32>
    %14 = arith.addf %11, %13 : vector<8x10xf32>
    %cst_11 = arith.constant 0.000000e+00 : f32
    %15 = vector.broadcast %cst_11 : f32 to vector<8x10xf32>
    %16 = arith.maximumf %14, %15 : vector<8x10xf32>
    %17 = arith.truncf %16 : vector<8x10xf32> to vector<8x10xbf16>
    %c0_12 = arith.constant 0 : index
    %c0_13 = arith.constant 0 : index
    %18 = vector.load %arg6[%c0_12, %c0_13] : memref<10x300xbf16, #tpu.memory_space<vmem>>, vector<10x300xbf16>
    %cst_14 = arith.constant dense<0.000000e+00> : vector<8x300xf32>
    %19 = tpu.matmul %17, %18, %cst_14 {dimension_numbers = #tpu.dot_dimension_numbers<[1], [0], [0], [1], [0, 0, 1, 1], [], []>} : vector<8x10xbf16>, vector<10x300xbf16>, vector<8x300xf32> -> vector<8x300xf32>
    %c0_15 = arith.constant 0 : index
    %c0_16 = arith.constant 0 : index
    %20 = vector.load %arg7[%c0_15, %c0_16] : memref<1x300xf32, #tpu.memory_space<vmem>>, vector<1x300xf32>
    %21 = vector.broadcast %20 : vector<1x300xf32> to vector<8x300xf32>
    %22 = arith.addf %19, %21 : vector<8x300xf32>
    %23 = arith.truncf %22 : vector<8x300xf32> to vector<8x300xbf16>
    %c0_17 = arith.constant 0 : index
    %c0_18 = arith.constant 0 : index
    %24 = vector.load %arg8[%c0_17, %c0_18] : memref<8x300xbf16, #tpu.memory_space<vmem>>, vector<8x300xbf16>
    tpu.vector_store %arg8[%c0_17, %c0_18], %23 {strides = array<i32>} : memref<8x300xbf16, #tpu.memory_space<vmem>>, vector<8x300xbf16>,
    return
  }
  func.func @transform_0(%arg0: i32) -> (i32, i32) {
    %c0_i32 = arith.constant 0 : i32
    %c0_i32_0 = arith.constant 0 : i32
    return %arg0, %c0_i32 : i32, i32
  }
  func.func @transform_1(%arg0: i32) -> (i32, i32) {
    %c0_i32 = arith.constant 0 : i32
    %c0_i32_0 = arith.constant 0 : i32
    %c0_i32_1 = arith.constant 0 : i32
    return %c0_i32, %c0_i32_0 : i32, i32
  }
  func.func @transform_2(%arg0: i32) -> (i32, i32) {
    %c0_i32 = arith.constant 0 : i32
    %c0_i32_0 = arith.constant 0 : i32
    %c0_i32_1 = arith.constant 0 : i32
    return %c0_i32, %c0_i32_0 : i32, i32
  }
  func.func @transform_3(%arg0: i32) -> (i32, i32) {
    %c0_i32 = arith.constant 0 : i32
    %c0_i32_0 = arith.constant 0 : i32
    %c0_i32_1 = arith.constant 0 : i32
    return %c0_i32, %c0_i32_0 : i32, i32
  }
  func.func @transform_4(%arg0: i32) -> (i32, i32) {
    %c0_i32 = arith.constant 0 : i32
    %c0_i32_0 = arith.constant 0 : i32
    %c0_i32_1 = arith.constant 0 : i32
    return %c0_i32, %c0_i32_0 : i32, i32
  }
  func.func @transform_5(%arg0: i32) -> (i32, i32) {
    %c0_i32 = arith.constant 0 : i32
    %c0_i32_0 = arith.constant 0 : i32
    %c0_i32_1 = arith.constant 0 : i32
    return %c0_i32, %c0_i32_0 : i32, i32
  }
  func.func @transform_6(%arg0: i32) -> (i32, i32) {
    %c0_i32 = arith.constant 0 : i32
    %c0_i32_0 = arith.constant 0 : i32
    %c0_i32_1 = arith.constant 0 : i32
    return %c0_i32, %c0_i32_0 : i32, i32
  }
  func.func @transform_7(%arg0: i32) -> (i32, i32) {
    %c0_i32 = arith.constant 0 : i32
    %c0_i32_0 = arith.constant 0 : i32
    return %arg0, %c0_i32 : i32, i32
  }
}

</mosaic_0001>

<llo_original>
// kernel: recommender_forward.1
$region0: #{recommender_forward.1}
  #allocation0 [shape = 'u32[]', space=smem, size = 0x4, offset = 0x4, fixed_abs, tag = 'smem constant byte address 0x4 - core index']
  #allocation1 [shape = 'u32[144,128]{1,0:T(1,128)}', space=vmem, size = 0x12000, scoped, tag = 'internal scratch']
  %s0 = inlined_call_operand.vmem [shape: f32[8,300], index: 0, kind: input, shape index: {}]
  %s1 = inlined_call_operand.vmem [shape: bf16[300,20], index: 1, kind: input, shape index: {}]
  %s2 = inlined_call_operand.vmem [shape: f32[1,20], index: 2, kind: input, shape index: {}]
  %s3 = inlined_call_operand.vmem [shape: bf16[20,10], index: 3, kind: input, shape index: {}]
  %s4 = inlined_call_operand.vmem [shape: f32[1,10], index: 4, kind: input, shape index: {}]
  %s5 = inlined_call_operand.vmem [shape: bf16[10,300], index: 5, kind: input, shape index: {}]
  %s6 = inlined_call_operand.vmem [shape: f32[1,300], index: 6, kind: input, shape index: {}]
  %s7 = inlined_call_operand.hbm [shape: bf16[8,300], index: 7, kind: output, shape index: {}]
  %s8 = sld [smem:[#allocation0]]
  $region38: #{recommender_forward.1} parent=0
    _
  %s10 = ssub.s32 1, %s8
  %s11 = scalar_select 0, %s10, %s8
  $region1: #{recommender_forward.1} parent=0
    #allocation2 [shape = 'u8[6144]{0}', space=vmem, size = 0x1800, scoped, tag = 'output window, operand 0, single buffered']
    #allocation3 [shape = 's32[1]{0}', space=sflag, size = 0x4, scoped, tag = 'scoped memory for recommender_forward.1']
    %12 = vsyncpa [#allocation3], 0
    // Predicated region
    $region2: #{recommender_forward.1} parent=1 // pred_check
      _
    $region3: #{recommender_forward.1} parent=1 // pred_check_branch
      %14 = sbr.rel (0) target = $region5
    $region4: #{recommender_forward.1} parent=1 // pred_region
      _
    $region5: #{recommender_forward.1} parent=1 // pred_fallthru
      _
    // Predicated region
    $region6: #{recommender_forward.1} parent=1 // pred_check
      _
    $region7: #{recommender_forward.1} parent=1 // pred_check_branch
      %16 = sbr.rel (0) target = $region9
    $region8: #{recommender_forward.1} parent=1 // pred_region
      _
    $region9: #{recommender_forward.1} parent=1 // pred_fallthru
      _
    // Predicated region
    $region10: #{recommender_forward.1} parent=1 // pred_check
      _
    $region11: #{recommender_forward.1} parent=1 // pred_check_branch
      %18 = sbr.rel (0) target = $region13
    $region12: #{recommender_forward.1} parent=1 // pred_region
      _
    $region13: #{recommender_forward.1} parent=1 // pred_fallthru
      _
    // Predicated region
    $region14: #{recommender_forward.1} parent=1 // pred_check
      _
    $region15: #{recommender_forward.1} parent=1 // pred_check_branch
      %20 = sbr.rel (0) target = $region17
    $region16: #{recommender_forward.1} parent=1 // pred_region
      _
    $region17: #{recommender_forward.1} parent=1 // pred_fallthru
      _
    // Predicated region
    $region18: #{recommender_forward.1} parent=1 // pred_check
      _
    $region19: #{recommender_forward.1} parent=1 // pred_check_branch
      %22 = sbr.rel (0) target = $region21
    $region20: #{recommender_forward.1} parent=1 // pred_region
      _
    $region21: #{recommender_forward.1} parent=1 // pred_fallthru
      _
    // Predicated region
    $region22: #{recommender_forward.1} parent=1 // pred_check
      _
    $region23: #{recommender_forward.1} parent=1 // pred_check_branch
      %24 = sbr.rel (0) target = $region25
    $region24: #{recommender_forward.1} parent=1 // pred_region
      _
    $region25: #{recommender_forward.1} parent=1 // pred_fallthru
      _
    // Predicated region
    $region26: #{recommender_forward.1} parent=1 // pred_check
      _
    $region27: #{recommender_forward.1} parent=1 // pred_check_branch
      %26 = sbr.rel (0) target = $region29
    $region28: #{recommender_forward.1} parent=1 // pred_region
      _
    $region29: #{recommender_forward.1} parent=1 // pred_fallthru
      _
    %v28 = vld [vmem:[%s0] sm:$0xff]
    %v29 = vld [vmem:[%s0 + $0x8] sm:$0xff]
    %v30 = vld [vmem:[%s0 + $0x10] sm:$0xff]
    %v31 = vpack.c.bf16 %v28, %v28
    %v32 = vpack.c.bf16 %v29, %v29
    %v33 = vpack.c.bf16 %v30, %v30
    %v34 = vld [vmem:[%s1] sm:$0xf]
    %v35 = vld [vmem:[%s1 + $0x4] sm:$0xf]
    %v36 = vld [vmem:[%s1 + $0x8] sm:$0xf]
    %v37 = vld [vmem:[%s1 + $0xc] sm:$0xf]
    %v38 = vld [vmem:[%s1 + $0x10] sm:$0xf]
    %v39 = vld [vmem:[%s1 + $0x14] sm:$0xf]
    %v40 = vld [vmem:[%s1 + $0x18] sm:$0xf]
    %v41 = vld [vmem:[%s1 + $0x1c] sm:$0xf]
    %v42 = vld [vmem:[%s1 + $0x20] sm:$0xf]
    %v43 = vld [vmem:[%s1 + $0x24] sm:$0xf]
    %v44 = vld [vmem:[%s1 + $0x28] sm:$0xf]
    %v45 = vld [vmem:[%s1 + $0x2c] sm:$0xf]
    %v46 = vld [vmem:[%s1 + $0x30] sm:$0xf]
    %v47 = vld [vmem:[%s1 + $0x34] sm:$0xf]
    %v48 = vld [vmem:[%s1 + $0x38] sm:$0xf]
    %v49 = vld [vmem:[%s1 + $0x3c] sm:$0xf]
    %v50 = vld [vmem:[%s1 + $0x40] sm:$0xf]
    %v51 = vld [vmem:[%s1 + $0x44] sm:$0xf]
    %v52 = vld [vmem:[%s1 + $0x48] sm:$0xf]
    %v53 = vld [vmem:[%s1 + $0x4c] sm:$0xf]
    %v54 = vld [vmem:[%s1 + $0x50] sm:$0xf]
    %v55 = vld [vmem:[%s1 + $0x54] sm:$0xf]
    %v56 = vld [vmem:[%s1 + $0x58] sm:$0xf]
    %v57 = vld [vmem:[%s1 + $0x5c] sm:$0xf]
    %v58 = vld [vmem:[%s1 + $0x60] sm:$0xf]
    %v59 = vld [vmem:[%s1 + $0x64] sm:$0xf]
    %v60 = vld [vmem:[%s1 + $0x68] sm:$0xf]
    %v61 = vld [vmem:[%s1 + $0x6c] sm:$0xf]
    %v62 = vld [vmem:[%s1 + $0x70] sm:$0xf]
    %v63 = vld [vmem:[%s1 + $0x74] sm:$0xf]
    %v64 = vld [vmem:[%s1 + $0x78] sm:$0xf]
    %v65 = vld [vmem:[%s1 + $0x7c] sm:$0xf]
    %v66 = vld [vmem:[%s1 + $0x80] sm:$0xf]
    %v67 = vld [vmem:[%s1 + $0x84] sm:$0xf]
    %v68 = vld [vmem:[%s1 + $0x88] sm:$0xf]
    %v69 = vld [vmem:[%s1 + $0x8c] sm:$0xf]
    %v70 = vld [vmem:[%s1 + $0x90] sm:$0xf]
    %v71 = vld [vmem:[%s1 + $0x94] sm:$0x3]
    %v72 = vld [vmem:[%s2] sm:$0x1]
    %v74 = vlaneseq
    %v75 = vshrl.u32 %v74, 7
    %v76 = vsub.s32 0, %v75
    %v77 = vrot.slane %v72, %v76
    %v117 = vunpack.c.l.b16 %v34
    %v118 = vunpack.c.l.b16 %v35
    %v119 = vunpack.c.l.b16 %v36
    %v120 = vunpack.c.l.b16 %v37
    %v121 = vunpack.c.l.b16 %v38
    %v122 = vunpack.c.l.b16 %v39
    %v123 = vunpack.c.l.b16 %v40
    %v124 = vunpack.c.l.b16 %v41
    %v125 = vunpack.c.l.b16 %v42
    %v126 = vunpack.c.l.b16 %v43
    %v127 = vunpack.c.l.b16 %v44
    %v128 = vunpack.c.l.b16 %v45
    %v129 = vunpack.c.l.b16 %v46
    %v130 = vunpack.c.l.b16 %v47
    %v131 = vunpack.c.l.b16 %v48
    %v132 = vunpack.c.l.b16 %v49
    %v133 = vunpack.c.l.b16 %v50
    %v134 = vunpack.c.l.b16 %v51
    %v135 = vunpack.c.l.b16 %v52
    %v136 = vunpack.c.l.b16 %v53
    %v137 = vunpack.c.l.b16 %v54
    %v138 = vunpack.c.l.b16 %v55
    %v139 = vunpack.c.l.b16 %v56
    %v140 = vunpack.c.l.b16 %v57
    %v141 = vunpack.c.l.b16 %v58
    %v142 = vunpack.c.l.b16 %v59
    %v143 = vunpack.c.l.b16 %v60
    %v144 = vunpack.c.l.b16 %v61
    %v145 = vunpack.c.l.b16 %v62
    %v146 = vunpack.c.l.b16 %v63
    %v147 = vunpack.c.l.b16 %v64
    %v148 = vunpack.c.l.b16 %v65
    %v149 = vunpack.c.l.b16 %v66
    %v150 = vunpack.c.l.b16 %v67
    %v151 = vunpack.c.l.b16 %v68
    %v152 = vunpack.c.l.b16 %v69
    %v153 = vunpack.c.l.b16 %v70
    %v154 = vunpack.c.l.b16 %v71
    %v155 = vpack.c.b16 %v118, %v117
    %v156 = vpack.c.b16 %v120, %v119
    %v157 = vpack.c.b16 %v122, %v121
    %v158 = vpack.c.b16 %v124, %v123
    %v159 = vpack.c.b16 %v126, %v125
    %v160 = vpack.c.b16 %v128, %v127
    %v161 = vpack.c.b16 %v130, %v129
    %v162 = vpack.c.b16 %v132, %v131
    %v163 = vpack.c.b16 %v134, %v133
    %v164 = vpack.c.b16 %v136, %v135
    %v165 = vpack.c.b16 %v138, %v137
    %v166 = vpack.c.b16 %v140, %v139
    %v167 = vpack.c.b16 %v142, %v141
    %v168 = vpack.c.b16 %v144, %v143
    %v169 = vpack.c.b16 %v146, %v145
    %v170 = vpack.c.b16 %v148, %v147
    %v171 = vpack.c.b16 %v150, %v149
    %v172 = vpack.c.b16 %v152, %v151
    %v173 = vpack.c.b16 %v154, %v153
    %vm192 = vcmask 359424
    %v194 = vsel %vm192, %v33, 0
    %vm196 = vcmask 1045504
    %v198 = vsel %vm196, %v173, 0
    %200 = vmatprep.subr.bf16.mxu0 0
    %201 = vmatpush1.bf16.msra.mxu0 %v155
    %202 = vmatprep.subr.bf16.mxu0 0
    %203 = vmatpush1.bf16.msra.mxu0 %v156
    %204 = vmatprep.subr.bf16.mxu0 0
    %205 = vmatpush1.bf16.msra.mxu0 %v157
    %206 = vmatprep.subr.bf16.mxu0 0
    %207 = vmatpush1.bf16.msra.mxu0 %v158
    %208 = vmatprep.subr.bf16.mxu0 0
    %209 = vmatpush1.bf16.msra.mxu0 %v159
    %210 = vmatprep.subr.bf16.mxu0 0
    %211 = vmatpush1.bf16.msra.mxu0 %v160
    %212 = vmatprep.subr.bf16.mxu0 0
    %213 = vmatpush1.bf16.msra.mxu0 %v161
    %214 = vmatprep.subr.bf16.mxu0 0
    %215 = vmatpush1.bf16.msra.mxu0 %v162
    %216 = vmatprep.subr.bf16.mxu0 0
    %217 = vmatpush1.bf16.msra.mxu0 %v163
    %218 = vmatprep.subr.bf16.mxu0 0
    %219 = vmatpush1.bf16.msra.mxu0 %v164
    %220 = vmatprep.subr.bf16.mxu0 0
    %221 = vmatpush1.bf16.msra.mxu0 %v165
    %222 = vmatprep.subr.bf16.mxu0 0
    %223 = vmatpush1.bf16.msra.mxu0 %v166
    %224 = vmatprep.subr.bf16.mxu0 0
    %225 = vmatpush1.bf16.msra.mxu0 %v167
    %226 = vmatprep.subr.bf16.mxu0 0
    %227 = vmatpush1.bf16.msra.mxu0 %v168
    %228 = vmatprep.subr.bf16.mxu0 0
    %229 = vmatpush1.bf16.msra.mxu0 %v169
    %230 = vmatprep.subr.bf16.mxu0 0
    %231 = vmatpush1.bf16.msra.mxu0 %v170
    %232 = vmatprep.mubr.bf16.mxu0 %v32
    %233 = vmatmul.mubr.bf16.gmra.mrb[0].mxu0 %v31
    %v234 = vpop.f32.mrb[0].mxu0
    %v235 = vadd.f32 %v77, %v234
    %v236 = vpop.f32.mrb[0].mxu0
    %v237 = vpop.f32.mrb[0].mxu0
    %v238 = vpop.f32.mrb[0].mxu0
    %239 = vdwg.mxu0
    %240 = vmatprep.subr.bf16.mxu0 0
    %241 = vmatpush1.bf16.msra.mxu0 %v171
    %242 = vmatprep.subr.bf16.mxu0 0
    %243 = vmatpush1.bf16.msra.mxu0 %v172
    %244 = vmatprep.subr.bf16.mxu0 0
    %245 = vmatpush1.bf16.msra.mxu0 %v198
    %246 = vmatprep.subr.bf16.mxu0 0
    %247 = vmatpush1.bf16.msra.mxu0 0
    %248 = vmatprep.subr.bf16.mxu0 0
    %249 = vmatpush1.bf16.msra.mxu0 0
    %250 = vmatprep.subr.bf16.mxu0 0
    %251 = vmatpush1.bf16.msra.mxu0 0
    %252 = vmatprep.subr.bf16.mxu0 0
    %253 = vmatpush1.bf16.msra.mxu0 0
    %254 = vmatprep.subr.bf16.mxu0 0
    %255 = vmatpush1.bf16.msra.mxu0 0
    %256 = vmatprep.subr.bf16.mxu0 0
    %257 = vmatpush1.bf16.msra.mxu0 0
    %258 = vmatprep.subr.bf16.mxu0 0
    %259 = vmatpush1.bf16.msra.mxu0 0
    %260 = vmatprep.subr.bf16.mxu0 0
    %261 = vmatpush1.bf16.msra.mxu0 0
    %262 = vmatprep.subr.bf16.mxu0 0
    %263 = vmatpush1.bf16.msra.mxu0 0
    %264 = vmatprep.subr.bf16.mxu0 0
    %265 = vmatpush1.bf16.msra.mxu0 0
    %266 = vmatprep.subr.bf16.mxu0 0
    %267 = vmatpush1.bf16.msra.mxu0 0
    %268 = vmatprep.subr.bf16.mxu0 0
    %269 = vmatpush1.bf16.msra.mxu0 0
    %270 = vmatprep.subr.bf16.mxu0 0
    %271 = vmatpush1.bf16.msra.mxu0 0
    %272 = vmatprep.mubr.bf16.mxu0 0
    %273 = vmatmul.mubr.bf16.gmra.mrb[0].mxu0 %v194
    %v274 = vpop.f32.mrb[0].mxu0
    %v275 = vadd.f32 %v235, %v274
    %v276 = vpop.f32.mrb[0].mxu0
    %v277 = vpop.f32.mrb[0].mxu0
    %v278 = vpop.f32.mrb[0].mxu0
    %279 = vdwg.mxu0
    %v280 = vmax.f32 %v275, 0.0
    %v281 = vld [vmem:[%s3] sm:$0xf]
    %v282 = vld [vmem:[%s3 + $0x4] sm:$0xf]
    %v283 = vld [vmem:[%s3 + $0x8] sm:$0x3]
    %v284 = vunpack.c.l.bf16 %v281
    %v285 = vunpack.c.l.bf16 %v282
    %v286 = vunpack.c.l.bf16 %v283
    %v287 = vld [vmem:[%s4] sm:$0x1]
    %v289 = vlaneseq
    %v290 = vshrl.u32 %v289, 7
    %v291 = vsub.s32 0, %v290
    %v292 = vrot.slane %v287, %v291
    %vm294 = vcmask 162816
    %v296 = vsel %vm294, %v280, 0
    %vm298 = vcmask 1043456
    %v300 = vsel %vm298, %v286, 0
    %302 = vmatprep.subr.mxu0 0.0
    %303 = vmatpush1.msra.mxu0 %v284
    %304 = vmatprep.subr.mxu0 0.0
    %305 = vmatpush1.msra.mxu0 %v285
    %306 = vmatprep.subr.mxu0 0.0
    %307 = vmatpush1.msra.mxu0 %v300
    %308 = vmatprep.subr.mxu0 0.0
    %309 = vmatpush1.msra.mxu0 0.0
    %310 = vmatprep.subr.mxu0 0.0
    %311 = vmatpush1.msra.mxu0 0.0
    %312 = vmatprep.subr.mxu0 0.0
    %313 = vmatpush1.msra.mxu0 0.0
    %314 = vmatprep.subr.mxu0 0.0
    %315 = vmatpush1.msra.mxu0 0.0
    %316 = vmatprep.subr.mxu0 0.0
    %317 = vmatpush1.msra.mxu0 0.0
    %318 = vmatprep.subr.mxu0 0.0
    %319 = vmatpush1.msra.mxu0 0.0
    %320 = vmatprep.subr.mxu0 0.0
    %321 = vmatpush1.msra.mxu0 0.0
    %322 = vmatprep.subr.mxu0 0.0
    %323 = vmatpush1.msra.mxu0 0.0
    %324 = vmatprep.subr.mxu0 0.0
    %325 = vmatpush1.msra.mxu0 0.0
    %326 = vmatprep.subr.mxu0 0.0
    %327 = vmatpush1.msra.mxu0 0.0
    %328 = vmatprep.subr.mxu0 0.0
    %329 = vmatpush1.msra.mxu0 0.0
    %330 = vmatprep.subr.mxu0 0.0
    %331 = vmatpush1.msra.mxu0 0.0
    %332 = vmatprep.subr.mxu0 0.0
    %333 = vmatpush1.msra.mxu0 0.0
    %334 = vmatprep.subr.mxu0 0.0
    %335 = vmatpush1.msra.mxu0 0.0
    %336 = vmatprep.subr.mxu0 0.0
    %337 = vmatpush1.msra.mxu0 0.0
    %338 = vmatprep.subr.mxu0 0.0
    %339 = vmatpush1.msra.mxu0 0.0
    %340 = vmatprep.subr.mxu0 0.0
    %341 = vmatpush1.msra.mxu0 0.0
    %342 = vmatprep.subr.mxu0 0.0
    %343 = vmatpush1.msra.mxu0 0.0
    %344 = vmatprep.subr.mxu0 0.0
    %345 = vmatpush1.msra.mxu0 0.0
    %346 = vmatprep.subr.mxu0 0.0
    %347 = vmatpush1.msra.mxu0 0.0
    %348 = vmatprep.subr.mxu0 0.0
    %349 = vmatpush1.msra.mxu0 0.0
    %350 = vmatprep.subr.mxu0 0.0
    %351 = vmatpush1.msra.mxu0 0.0
    %352 = vmatprep.subr.mxu0 0.0
    %353 = vmatpush1.msra.mxu0 0.0
    %354 = vmatprep.subr.mxu0 0.0
    %355 = vmatpush1.msra.mxu0 0.0
    %356 = vmatprep.subr.mxu0 0.0
    %357 = vmatpush1.msra.mxu0 0.0
    %358 = vmatprep.subr.mxu0 0.0
    %359 = vmatpush1.msra.mxu0 0.0
    %360 = vmatprep.subr.mxu0 0.0
    %361 = vmatpush1.msra.mxu0 0.0
    %362 = vmatprep.subr.mxu0 0.0
    %363 = vmatpush1.msra.mxu0 0.0
    %364 = vmatprep.subr.mxu0 0.0
    %365 = vmatpush1.msra.mxu0 0.0
    %366 = vmatprep.mubr.f32.mxu0 0.0
    %367 = vmatmul.mubr.f32.gmra.mrb[0].mxu0 %v296
    %v368 = vpop.f32.mrb[0].mxu0
    %v369 = vadd.f32 %v292, %v368
    %v370 = vpop.f32.mrb[0].mxu0
    %371 = vdwg.mxu0
    %v372 = vmax.f32 %v369, 0.0
    %v373 = vpack.c.bf16 %v372, %v372
    %v374 = vld [vmem:[%s5] sm:$0xff]
    %v375 = vld [vmem:[%s5 + $0x8] sm:$0xf]
    %v376 = vld [vmem:[%s5 + $0xc] sm:$0x11]
    %v377 = vld [vmem:[%s5 + $0x14] sm:$0x1]
    %v378 = vld [vmem:[%s6] sm:$0x7]
    %v380 = vlaneseq
    %v381 = vshrl.u32 %v380, 7
    %v382 = vsub.s32 0, %v381
    %v383 = vrot.slane %v378, %v382
    %v384 = vlaneseq
    %v385 = vshrl.u32 %v384, 7
    %v386 = vsub.s32 1, %v385
    %v387 = vrot.slane %v378, %v386
    %v388 = vlaneseq
    %v389 = vshrl.u32 %v388, 7
    %v390 = vsub.s32 2, %v389
    %v391 = vrot.slane %v378, %v390
    %v399 = vunpack.c.l.b16 %v374
    %v400 = vunpack.c.h.b16 %v374
    %v401 = vunpack.c.l.b16 %v375
    %v402 = vunpack.c.l.b16 %v376
    %v403 = vunpack.c.h.b16 %v376
    %v404 = vunpack.c.l.b16 %v377
    %v405 = vpack.c.b16 %v402, %v399
    %v406 = vpack.c.b16 %v403, %v400
    %v407 = vpack.c.b16 %v404, %v401
    %vm408 = vcmask 80896
    %v410 = vsel %vm408, %v373, 0
    %vm412 = vcmask 1044480
    %v414 = vsel %vm412, %v405, 0
    %v417 = vsel %vm412, %v406, 0
    %v420 = vsel %vm412, %v407, 0
    %422 = vmatprep.subr.bf16.mxu0 %v417
    %423 = vmatpush1.bf16.msra.mxu0 %v414
    %424 = vmatprep.subr.bf16.mxu0 0
    %425 = vmatpush1.bf16.msra.mxu0 0
    %426 = vmatprep.subr.bf16.mxu0 0
    %427 = vmatpush1.bf16.msra.mxu0 0
    %428 = vmatprep.subr.bf16.mxu0 0
    %429 = vmatpush1.bf16.msra.mxu0 0
    %430 = vmatprep.subr.bf16.mxu0 0
    %431 = vmatpush1.bf16.msra.mxu0 0
    %432 = vmatprep.subr.bf16.mxu0 0
    %433 = vmatpush1.bf16.msra.mxu0 0
    %434 = vmatprep.subr.bf16.mxu0 0
    %435 = vmatpush1.bf16.msra.mxu0 0
    %436 = vmatprep.subr.bf16.mxu0 0
    %437 = vmatpush1.bf16.msra.mxu0 0
    %438 = vmatprep.subr.bf16.mxu0 0
    %439 = vmatpush1.bf16.msra.mxu0 0
    %440 = vmatprep.subr.bf16.mxu0 0
    %441 = vmatpush1.bf16.msra.mxu0 0
    %442 = vmatprep.subr.bf16.mxu0 0
    %443 = vmatpush1.bf16.msra.mxu0 0
    %444 = vmatprep.subr.bf16.mxu0 0
    %445 = vmatpush1.bf16.msra.mxu0 0
    %446 = vmatprep.subr.bf16.mxu0 0
    %447 = vmatpush1.bf16.msra.mxu0 0
    %448 = vmatprep.subr.bf16.mxu0 0
    %449 = vmatpush1.bf16.msra.mxu0 0
    %450 = vmatprep.subr.bf16.mxu0 0
    %451 = vmatpush1.bf16.msra.mxu0 0
    %452 = vmatprep.subr.bf16.mxu0 0
    %453 = vmatpush1.bf16.msra.mxu0 0
    %454 = vmatprep.mubr.bf16.mxu0 0
    %455 = vmatmul.mubr.bf16.gmra.mrb[0].mxu0 %v410
    %v456 = vpop.f32.mrb[0].mxu0
    %v457 = vadd.f32 %v383, %v456
    %v458 = vpop.f32.mrb[0].mxu0
    %v459 = vadd.f32 %v387, %v458
    %v460 = vpop.f32.mrb[0].mxu0
    %v461 = vpop.f32.mrb[0].mxu0
    %462 = vdwg.mxu0
    %463 = vmatprep.subr.bf16.mxu0 0
    %464 = vmatpush1.bf16.msra.mxu0 %v420
    %465 = vmatprep.subr.bf16.mxu0 0
    %466 = vmatpush1.bf16.msra.mxu0 0
    %467 = vmatprep.subr.bf16.mxu0 0
    %468 = vmatpush1.bf16.msra.mxu0 0
    %469 = vmatprep.subr.bf16.mxu0 0
    %470 = vmatpush1.bf16.msra.mxu0 0
    %471 = vmatprep.subr.bf16.mxu0 0
    %472 = vmatpush1.bf16.msra.mxu0 0
    %473 = vmatprep.subr.bf16.mxu0 0
    %474 = vmatpush1.bf16.msra.mxu0 0
    %475 = vmatprep.subr.bf16.mxu0 0
    %476 = vmatpush1.bf16.msra.mxu0 0
    %477 = vmatprep.subr.bf16.mxu0 0
    %478 = vmatpush1.bf16.msra.mxu0 0
    %479 = vmatprep.subr.bf16.mxu0 0
    %480 = vmatpush1.bf16.msra.mxu0 0
    %481 = vmatprep.subr.bf16.mxu0 0
    %482 = vmatpush1.bf16.msra.mxu0 0
    %483 = vmatprep.subr.bf16.mxu0 0
    %484 = vmatpush1.bf16.msra.mxu0 0
    %485 = vmatprep.subr.bf16.mxu0 0
    %486 = vmatpush1.bf16.msra.mxu0 0
    %487 = vmatprep.subr.bf16.mxu0 0
    %488 = vmatpush1.bf16.msra.mxu0 0
    %489 = vmatprep.subr.bf16.mxu0 0
    %490 = vmatpush1.bf16.msra.mxu0 0
    %491 = vmatprep.subr.bf16.mxu0 0
    %492 = vmatpush1.bf16.msra.mxu0 0
    %493 = vmatprep.subr.bf16.mxu0 0
    %494 = vmatpush1.bf16.msra.mxu0 0
    %495 = vmatprep.mubr.bf16.mxu0 0
    %496 = vmatmul.mubr.bf16.gmra.mrb[0].mxu0 %v410
    %v497 = vpop.f32.mrb[0].mxu0
    %v498 = vadd.f32 %v391, %v497
    %v499 = vpop.f32.mrb[0].mxu0
    %v500 = vpop.f32.mrb[0].mxu0
    %v501 = vpop.f32.mrb[0].mxu0
    %502 = vdwg.mxu0
    %v503 = vpack.c.bf16 %v457, %v457
    %v504 = vpack.c.bf16 %v459, %v459
    %v505 = vpack.c.bf16 %v498, %v498
    %v509 = vunpack.c.l.b16 %v503
    %v510 = vunpack.c.l.b16 %v504
    %v511 = vunpack.c.l.b16 %v505
    %v512 = vpack.c.b16 %v510, %v509
    %v513 = vpack.c.b16 %v511, %v511
    %516 = vst [vmem:[#allocation2] sm:$0xff] %v512
    %vm517 = vcmask 355328
    %518 = vst.msk [vmem:[#allocation2 + $0x8] sm:$0xf] %vm517, %v513
    // Predicated region
    $region30: #{recommender_forward.1} parent=1 // pred_check
      _
    $region31: #{recommender_forward.1} parent=1 // pred_check_branch
      %520 = sbr.rel (0) target = $region33
    $region32: #{recommender_forward.1} parent=1 // pred_region
      %s522 = ssub.s32 192, 192
      %523 = vsyncadd [#allocation3], %s522
      %s525 = sshll.u32 [#allocation2], 4
      %s526 = int_to_ptr.vmem [resolvable:$true] %s525
      %528 = dma.vmem_to_hbm [thread:$0]  %s526, 192, %s7, [#allocation3]
    $region33: #{recommender_forward.1} parent=1 // pred_fallthru
      _
    // Predicated region
    $region34: #{recommender_forward.1} parent=1 // pred_check
      _
    $region35: #{recommender_forward.1} parent=1 // pred_check_branch
      %530 = sbr.rel (0) target = $region37
    $region36: #{recommender_forward.1} parent=1 // pred_region
      %531 = dma.done [#allocation3], 192
    $region37: #{recommender_forward.1} parent=1 // pred_fallthru
      _
    %532 = vsyncpa [#allocation3], 1

</llo_original>
